<compile_context>
chip_gen: v7x
topology: tpu7x:2x2x1
jax: 0.10.0
libtpu: 0.0.40
codegen_flags: <defaults>
</compile_context>

<pallas_src>
import functools

import jax
import jax.numpy as jnp
from jax import lax
from jax.experimental import pallas as pl
from jax.experimental.pallas import tpu as pltpu

LANES = 128
SUBLANES = 8
_CHUNK_ROWS = 512                 # 512 x 128 f32 chunk = 256 KiB of live temporaries
_TARGET_TILE_BYTES = 2 << 20      # ~2 MiB per input tile (double-buffered x 2 inputs
                                  # = ~8 MiB pipelined footprint, fits all chips)


def _round_up(a, b):
    return (a + b - 1) // b * b


def _wbce_partial_kernel(x_ref, t_ref, out_ref, *, pos_weight, neg_weight,
                         chunk_rows, num_chunks):
    """Reduce one (row_tile, 128) tile to an (8, 128) weighted-BCE partial sum."""
    eps = 1e-16

    def body(c, carry):
        pos_acc, neg_acc = carry
        start = pl.multiple_of(c * chunk_rows, chunk_rows)
        x = x_ref[pl.ds(start, chunk_rows), :].astype(jnp.float32)
        t = t_ref[pl.ds(start, chunk_rows), :].astype(jnp.float32)
        log_x = jnp.log(jnp.maximum(x, eps))
        log_1mx = jnp.log(jnp.maximum(1.0 - x, eps))
        pos = t * log_x                      # sum of t * log(clamp(x, eps))
        neg = (1.0 - t) * log_1mx            # sum of (1-t) * log(clamp(1-x, eps))
        k = chunk_rows // SUBLANES
        # Leading-axis reduce == cheap VPU vreg adds; stays lane/sublane dense.
        pos_acc = pos_acc + jnp.sum(pos.reshape(k, SUBLANES, LANES), axis=0)
        neg_acc = neg_acc + jnp.sum(neg.reshape(k, SUBLANES, LANES), axis=0)
        return pos_acc, neg_acc

    zero = jnp.zeros((SUBLANES, LANES), jnp.float32)
    pos_p, neg_p = lax.fori_loop(0, num_chunks, body, (zero, zero), unroll=True)

    # Apply the (compile-time constant) weights once per tile, not per element.
    out_ref[...] = (-(pos_weight * pos_p + neg_weight * neg_p)).reshape(
        1, SUBLANES, LANES)


def weighted_bce_loss(sigmoid_x, targets, pos_weight=1.0, neg_weight=1.0,
                      *, size_average=True):
    """Pallas implementation of WeightedBCELoss().forward(sigmoid_x, targets).

    sigmoid_x, targets: same-shape float arrays (probabilities / one-hot-like).
    Returns a scalar float32 (mean-reduced loss by default).
    """
    if sigmoid_x.shape != targets.shape:
        raise ValueError(
            "Target size ({}) must be the same as input size ({})".format(
                targets.shape, sigmoid_x.shape))

    total = sigmoid_x.size

    # Lane-dense flatten + zero pad (zero padding contributes zero loss).
    x_flat = sigmoid_x.reshape(-1)
    t_flat = targets.reshape(-1)

    rows = pl.cdiv(total, LANES)
    rows_aligned = _round_up(rows, SUBLANES)
    chunk_rows = min(_CHUNK_ROWS, rows_aligned)
    bytes_per_row = LANES * jnp.dtype(sigmoid_x.dtype).itemsize
    chunks_per_tile = max(
        1,
        min(_TARGET_TILE_BYTES // (chunk_rows * bytes_per_row),
            pl.cdiv(rows_aligned, chunk_rows)))
    row_tile = chunk_rows * chunks_per_tile
    num_tiles = pl.cdiv(rows_aligned, row_tile)
    rows_padded = num_tiles * row_tile

    pad = rows_padded * LANES - total
    if pad:
        x_flat = jnp.pad(x_flat, (0, pad))
        t_flat = jnp.pad(t_flat, (0, pad))
    x2d = x_flat.reshape(rows_padded, LANES)
    t2d = t_flat.reshape(rows_padded, LANES)

    kernel = functools.partial(
        _wbce_partial_kernel,
        pos_weight=float(pos_weight), neg_weight=float(neg_weight),
        chunk_rows=chunk_rows, num_chunks=chunks_per_tile)

    partials = pl.pallas_call(
        kernel,
        out_shape=jax.ShapeDtypeStruct((num_tiles, SUBLANES, LANES), jnp.float32),
        grid_spec=pltpu.PrefetchScalarGridSpec(
            num_scalar_prefetch=0,
            grid=(num_tiles,),
            in_specs=[
                pl.BlockSpec((row_tile, LANES), lambda i: (i, 0)),   # sigmoid_x tile
                pl.BlockSpec((row_tile, LANES), lambda i: (i, 0)),   # targets tile
            ],
            out_specs=pl.BlockSpec((1, SUBLANES, LANES), lambda i: (i, 0, 0)),
        ),
        compiler_params=pltpu.CompilerParams(
            # Independent partial blocks per step -> safe to shard across
            # TensorCores (v7x megacore); no effect on single-TC v5e/v6e.
            dimension_semantics=("parallel",),
        ),
    )(x2d, t2d)

    loss_sum = jnp.sum(partials)          # tiny final cross-lane reduce in XLA
    if size_average:
        return loss_sum / jnp.float32(total)
    return loss_sum

    # TODO(synk): per-class `weight` buffer, PosNegWeightIsDynamic (per-batch
    # pos/neg counts as traced weights) and reduce=False (elementwise output)
    # are non-default paths and are not implemented here.


def _reference(sigmoid_x, targets, pos_weight=1.0, neg_weight=1.0):
    eps = 1e-16
    loss = (-pos_weight * targets * jnp.log(jnp.maximum(sigmoid_x, eps))
            - neg_weight * (1.0 - targets)
            * jnp.log(jnp.maximum(1.0 - sigmoid_x, eps)))
    return jnp.mean(loss)


if __name__ == "__main__":
    key = jax.random.PRNGKey(0)
    k1, k2, k3, k4 = jax.random.split(key, 4)

    # Small [N, C] case consistent with the module's [sample, class] convention.
    N, C = 16, 128
    x = jax.nn.sigmoid(jax.random.normal(k1, (N, C), dtype=jnp.float32))
    t = (jax.random.uniform(k2, (N, C)) > 0.5).astype(jnp.float32)

    loss = jax.block_until_ready(weighted_bce_loss(x, t, 1.0, 1.0))
    ref = _reference(x, t, 1.0, 1.0)
    assert jnp.allclose(loss, ref, rtol=1e-5, atol=1e-5), (loss, ref)

    # Non-lane-aligned shape exercises the flatten + zero-pad path.
    x2 = jax.nn.sigmoid(jax.random.normal(k3, (6, 37), dtype=jnp.float32))
    t2 = (jax.random.uniform(k4, (6, 37)) > 0.5).astype(jnp.float32)
    loss2 = jax.block_until_ready(weighted_bce_loss(x2, t2, 1.0, 1.0))
    ref2 = _reference(x2, t2, 1.0, 1.0)
    assert jnp.allclose(loss2, ref2, rtol=1e-5, atol=1e-5), (loss2, ref2)

    print("KERNEL_OK")
</pallas_src>

<mosaic_0001>
module attributes {stable_mosaic.version = 11 : i64} {
  func.func @_wbce_partial_kernel(%arg0: i32, %arg1: memref<16x128xf32, #tpu.memory_space<vmem>>, %arg2: memref<16x128xf32, #tpu.memory_space<vmem>>, %arg3: memref<1x8x128xf32, #tpu.memory_space<vmem>>) attributes {dimension_semantics = [#tpu.dimension_semantics<parallel>], iteration_bounds = array<i64: 1>, scalar_prefetch = 0 : i64, scratch_operands = 0 : i64, tpu.core_type = #tpu.core_type<tc>, window_params = [{transform_indices = @transform_0, window_bounds = array<i64: 16, 128>}, {transform_indices = @transform_1, window_bounds = array<i64: 16, 128>}, {transform_indices = @transform_2, window_bounds = array<i64: 1, 8, 128>}]} {
    %cst = arith.constant 0.000000e+00 : f32
    %0 = vector.broadcast %cst : f32 to vector<8x128xf32>
    %c0_i32 = arith.constant 0 : i32
    %c16_i32 = arith.constant 16 : i32
    %1 = arith.muli %c0_i32, %c16_i32 : i32
    %2 = tpu.assume_multiple %1, 16 : i32
    %3 = arith.index_cast %2 : i32 to index
    %c0 = arith.constant 0 : index
    %4 = vector.load %arg1[%3, %c0] : memref<16x128xf32, #tpu.memory_space<vmem>>, vector<16x128xf32>
    %5 = arith.index_cast %2 : i32 to index
    %c0_0 = arith.constant 0 : index
    %6 = vector.load %arg2[%5, %c0_0] : memref<16x128xf32, #tpu.memory_space<vmem>>, vector<16x128xf32>
    %cst_1 = arith.constant 1.000000e-16 : f32
    %7 = vector.broadcast %cst_1 : f32 to vector<16x128xf32>
    %8 = arith.maximumf %4, %7 : vector<16x128xf32>
    %9 = math.log %8 : vector<16x128xf32>
    %cst_2 = arith.constant 1.000000e+00 : f32
    %10 = vector.broadcast %cst_2 : f32 to vector<16x128xf32>
    %11 = arith.subf %10, %4 : vector<16x128xf32>
    %cst_3 = arith.constant 1.000000e-16 : f32
    %12 = vector.broadcast %cst_3 : f32 to vector<16x128xf32>
    %13 = arith.maximumf %11, %12 : vector<16x128xf32>
    %14 = math.log %13 : vector<16x128xf32>
    %15 = arith.mulf %6, %9 : vector<16x128xf32>
    %cst_4 = arith.constant 1.000000e+00 : f32
    %16 = vector.broadcast %cst_4 : f32 to vector<16x128xf32>
    %17 = arith.subf %16, %6 : vector<16x128xf32>
    %18 = arith.mulf %17, %14 : vector<16x128xf32>
    %19 = vector.shape_cast %15 : vector<16x128xf32> to vector<2x8x128xf32>
    %cst_5 = arith.constant dense<0.000000e+00> : vector<8x128xf32>
    %20 = vector.multi_reduction <add>, %19, %cst_5 [0] : vector<2x8x128xf32> to vector<8x128xf32>
    %21 = arith.addf %0, %20 : vector<8x128xf32>
    %22 = vector.shape_cast %18 : vector<16x128xf32> to vector<2x8x128xf32>
    %cst_6 = arith.constant dense<0.000000e+00> : vector<8x128xf32>
    %23 = vector.multi_reduction <add>, %22, %cst_6 [0] : vector<2x8x128xf32> to vector<8x128xf32>
    %24 = arith.addf %0, %23 : vector<8x128xf32>
    %c1_i32 = arith.constant 1 : i32
    %cst_7 = arith.constant 1.000000e+00 : f32
    %25 = vector.broadcast %cst_7 : f32 to vector<8x128xf32>
    %26 = arith.mulf %25, %21 : vector<8x128xf32>
    %cst_8 = arith.constant 1.000000e+00 : f32
    %27 = vector.broadcast %cst_8 : f32 to vector<8x128xf32>
    %28 = arith.mulf %27, %24 : vector<8x128xf32>
    %29 = arith.addf %26, %28 : vector<8x128xf32>
    %cst_9 = arith.constant 0.000000e+00 : f32
    %30 = vector.broadcast %cst_9 : f32 to vector<8x128xf32>
    %31 = arith.subf %30, %29 : vector<8x128xf32>
    %32 = vector.shape_cast %31 : vector<8x128xf32> to vector<1x8x128xf32>
    %c0_10 = arith.constant 0 : index
    %c0_11 = arith.constant 0 : index
    %c0_12 = arith.constant 0 : index
    %33 = vector.load %arg3[%c0_10, %c0_11, %c0_12] : memref<1x8x128xf32, #tpu.memory_space<vmem>>, vector<1x8x128xf32>
    tpu.vector_store %arg3[%c0_10, %c0_11, %c0_12], %32 {strides = array<i32>} : memref<1x8x128xf32, #tpu.memory_space<vmem>>, vector<1x8x128xf32>,
    return
  }
  func.func @transform_0(%arg0: i32) -> (i32, i32) {
    %c0_i32 = arith.constant 0 : i32
    %c0_i32_0 = arith.constant 0 : i32
    return %arg0, %c0_i32 : i32, i32
  }
  func.func @transform_1(%arg0: i32) -> (i32, i32) {
    %c0_i32 = arith.constant 0 : i32
    %c0_i32_0 = arith.constant 0 : i32
    return %arg0, %c0_i32 : i32, i32
  }
  func.func @transform_2(%arg0: i32) -> (i32, i32, i32) {
    %c0_i32 = arith.constant 0 : i32
    %c0_i32_0 = arith.constant 0 : i32
    %c0_i32_1 = arith.constant 0 : i32
    return %arg0, %c0_i32, %c0_i32_0 : i32, i32, i32
  }
}

</mosaic_0001>

<llo_original>
// kernel: tpu_custom_call.1
$region0: #{tpu_custom_call.1}
  #allocation0 [shape = 'u32[]', space=smem, size = 0x4, offset = 0x4, fixed_abs, tag = 'smem constant byte address 0x4 - core index']
  #allocation1 [shape = 'u32[144,128]{1,0:T(1,128)}', space=vmem, size = 0x12000, scoped, tag = 'internal scratch']
  %s0 = inlined_call_operand.hbm [shape: f32[16,128], index: 0, kind: input, shape index: {}]
  %s1 = inlined_call_operand.hbm [shape: f32[16,128], index: 1, kind: input, shape index: {}]
  %s2 = inlined_call_operand.hbm [shape: f32[1,8,128], index: 2, kind: output, shape index: {}]
  %s3 = sld [smem:[#allocation0]]
  $region26: #{tpu_custom_call.1} parent=0
    _
  %s5 = ssub.s32 1, %s3
  %s6 = scalar_select 0, %s5, %s3
  $region1: #{tpu_custom_call.1} parent=0
    #allocation2 [shape = 'u8[8192]{0}', space=vmem, size = 0x2000, scoped, tag = 'input window, operand 0, single buffered']
    #allocation3 [shape = 's32[1]{0}', space=sflag, size = 0x4, scoped, tag = 'scoped memory for tpu_custom_call.1']
    #allocation4 [shape = 's32[1]{0}', space=sflag, size = 0x4, scoped, tag = 'scoped memory for tpu_custom_call.1']
    #allocation5 [shape = 'u8[8192]{0}', space=vmem, size = 0x2000, scoped, tag = 'input window, operand 1, single buffered']
    #allocation6 [shape = 's32[1]{0}', space=sflag, size = 0x4, scoped, tag = 'scoped memory for tpu_custom_call.1']
    #allocation7 [shape = 'u8[4096]{0}', space=vmem, size = 0x1000, scoped, tag = 'output window, operand 0, single buffered']
    %7 = vsyncpa [#allocation3], 0
    %8 = vsyncpa [#allocation6], 0
    %9 = vsyncpa [#allocation4], 0
    // Predicated region
    $region2: #{tpu_custom_call.1} parent=1 // pred_check
      _
    $region3: #{tpu_custom_call.1} parent=1 // pred_check_branch
      %11 = sbr.rel (0) target = $region5
    $region4: #{tpu_custom_call.1} parent=1 // pred_region
      %s13 = ssub.s32 256, 256
      %14 = vsyncadd [#allocation3], %s13
      %s15 = sshll.u32 [#allocation2], 4
      %s16 = int_to_ptr.vmem [resolvable:$true] %s15
      %21 = dma.hbm_to_vmem [thread:$0]  %s0, 256, %s16, [#allocation3], 128, 128, 8
    $region5: #{tpu_custom_call.1} parent=1 // pred_fallthru
      _
    // Predicated region
    $region6: #{tpu_custom_call.1} parent=1 // pred_check
      _
    $region7: #{tpu_custom_call.1} parent=1 // pred_check_branch
      %23 = sbr.rel (0) target = $region9
    $region8: #{tpu_custom_call.1} parent=1 // pred_region
      %s25 = ssub.s32 256, 256
      %26 = vsyncadd [#allocation6], %s25
      %s27 = sshll.u32 [#allocation5], 4
      %s28 = int_to_ptr.vmem [resolvable:$true] %s27
      %33 = dma.hbm_to_vmem [thread:$0]  %s1, 256, %s28, [#allocation6], 128, 128, 8
    $region9: #{tpu_custom_call.1} parent=1 // pred_fallthru
      _
    // Predicated region
    $region10: #{tpu_custom_call.1} parent=1 // pred_check
      _
    $region11: #{tpu_custom_call.1} parent=1 // pred_check_branch
      %35 = sbr.rel (0) target = $region13
    $region12: #{tpu_custom_call.1} parent=1 // pred_region
      %36 = dma.done [#allocation3], 256
    $region13: #{tpu_custom_call.1} parent=1 // pred_fallthru
      _
    // Predicated region
    $region14: #{tpu_custom_call.1} parent=1 // pred_check
      _
    $region15: #{tpu_custom_call.1} parent=1 // pred_check_branch
      %38 = sbr.rel (0) target = $region17
    $region16: #{tpu_custom_call.1} parent=1 // pred_region
      %39 = dma.done [#allocation6], 256
    $region17: #{tpu_custom_call.1} parent=1 // pred_fallthru
      _
    %v40 = vld [vmem:[#allocation2] sm:$0xff]
    %v41 = vld [vmem:[#allocation2 + $0x8] sm:$0xff]
    %v42 = vld [vmem:[#allocation5] sm:$0xff]
    %v43 = vld [vmem:[#allocation5 + $0x8] sm:$0xff]
    %v44 = vmax.f32 %v40, 1e-16
    %v45 = vmax.f32 %v41, 1e-16
    %v46 = vlog2.pop %v44
    %v47 = vmul.f32 %v46, 0.6931472
    %v48 = vlog2.pop %v45
    %v49 = vmul.f32 %v48, 0.6931472
    %v50 = vsub.f32 1.0, %v40
    %v51 = vsub.f32 1.0, %v41
    %v52 = vmax.f32 %v50, 1e-16
    %v53 = vmax.f32 %v51, 1e-16
    %v54 = vlog2.pop %v52
    %v55 = vmul.f32 %v54, 0.6931472
    %v56 = vlog2.pop %v53
    %v57 = vmul.f32 %v56, 0.6931472
    %v58 = vmul.f32 %v42, %v47
    %v59 = vmul.f32 %v43, %v49
    %v60 = vsub.f32 1.0, %v42
    %v61 = vsub.f32 1.0, %v43
    %v62 = vmul.f32 %v60, %v55
    %v63 = vmul.f32 %v61, %v57
    %v64 = vadd.f32 %v58, %v59
    %v65 = vadd.f32 %v64, 0.0
    %v66 = vadd.f32 %v62, %v63
    %v67 = vadd.f32 %v66, 0.0
    %v68 = vadd.f32 %v65, %v67
    %v69 = vsub.f32 0.0, %v68
    %70 = vst [vmem:[#allocation7] sm:$0xff] %v69
    // Predicated region
    $region18: #{tpu_custom_call.1} parent=1 // pred_check
      _
    $region19: #{tpu_custom_call.1} parent=1 // pred_check_branch
      %72 = sbr.rel (0) target = $region21
    $region20: #{tpu_custom_call.1} parent=1 // pred_region
      %s74 = ssub.s32 128, 128
      %75 = vsyncadd [#allocation4], %s74
      %s77 = sshll.u32 [#allocation7], 4
      %s78 = int_to_ptr.vmem [resolvable:$true] %s77
      %80 = dma.vmem_to_hbm [thread:$0]  %s78, 128, %s2, [#allocation4]
    $region21: #{tpu_custom_call.1} parent=1 // pred_fallthru
      _
    // Predicated region
    $region22: #{tpu_custom_call.1} parent=1 // pred_check
      _
    $region23: #{tpu_custom_call.1} parent=1 // pred_check_branch
      %82 = sbr.rel (0) target = $region25
    $region24: #{tpu_custom_call.1} parent=1 // pred_region
      %83 = dma.done [#allocation4], 128
    $region25: #{tpu_custom_call.1} parent=1 // pred_fallthru
      _
    %84 = vsyncpa [#allocation3], 1
    %85 = vsyncpa [#allocation6], 1
    %86 = vsyncpa [#allocation4], 1

</llo_original>
